<compile_context>
chip_gen: v5e
topology: v5e:2x2
jax: 0.10.0
libtpu: 0.0.40
codegen_flags: <defaults>
</compile_context>

<pallas_src>
import functools

import jax
import jax.numpy as jnp
from jax import lax
from jax.experimental import pallas as pl
from jax.experimental.pallas import tpu as pltpu


def _balanced_entropy_kernel(logits_ref, targets_ref, weights_ref, out_ref, *,
                             n_total):
    # logits_ref : (T, C) input dtype (bf16/f32) VMEM
    # targets_ref: (T, 1) int32 VMEM
    # weights_ref: (1, C) float32 VMEM (same block every grid step -> resident)
    # out_ref    : (T, 1) float32 VMEM (per-row loss for this tile)
    x = logits_ref[...].astype(jnp.float32)                   # (T, C)
    t = targets_ref[...]                                      # (T, 1)
    w = weights_ref[...]                                      # (1, C)
    tile_n, c = x.shape

    # Numerically stable log-sum-exp along the class (lane) axis.
    m = jnp.max(x, axis=1, keepdims=True)                     # (T, 1)
    lse = m + jnp.log(jnp.sum(jnp.exp(x - m), axis=1, keepdims=True))  # (T, 1)

    # loss_i = -w[t_i] * (x[i, t_i] - lse_i), gathered with ONE fused one-hot
    # masked lane reduction (no full log_probs tile is ever materialized).
    class_ids = lax.broadcasted_iota(jnp.int32, (tile_n, c), 1)
    one_hot = class_ids == t                                   # (T, C) bool
    w_b = jnp.broadcast_to(w, (tile_n, c))                     # (T, C)
    contrib = jnp.where(one_hot, w_b * (x - lse), 0.0)         # (T, C)
    loss = -jnp.sum(contrib, axis=1, keepdims=True)            # (T, 1)

    # Zero out remainder rows of a partial last tile (true N baked statically).
    row_ids = (pl.program_id(0) * tile_n
               + lax.broadcasted_iota(jnp.int32, (tile_n, 1), 0))
    out_ref[...] = jnp.where(row_ids < n_total, loss, 0.0)


def _round_up(x, m):
    return ((x + m - 1) // m) * m


def balanced_entropy_loss(logits, targets, class_weights=None, *, block_n=None):
    """JAX/Pallas equivalent of BalancedEntropyLoss.forward.

    logits: (N, C) float (f32/bf16), targets: (N,) int, class_weights: optional (C,).
    Returns scalar float32 loss = mean_i( -w[t_i] * log_softmax(logits)[i, t_i] ).
    """
    if logits.shape[0] != targets.shape[0]:
        raise ValueError("The number of inputs and targets must match.")
    n, c = logits.shape
    if class_weights is None:
        class_weights = jnp.ones((c,), jnp.float32)

    targets_2d = targets.astype(jnp.int32).reshape(n, 1)
    weights_2d = class_weights.astype(jnp.float32).reshape(1, c)

    dsize = jnp.dtype(logits.dtype).itemsize
    if block_n is None:
        # ~16 MiB of double-buffered logits tiles; cap at 1024 rows.
        budget = 16 * 1024 * 1024
        block_n = max(8, min(1024, budget // max(1, 2 * c * dsize)))
    block_n = max(8, min(_round_up(block_n, 8), _round_up(n, 8)))
    grid = (pl.cdiv(n, block_n),)

    cost = pl.CostEstimate(
        flops=6 * n * c,
        transcendentals=n * c,
        bytes_accessed=n * c * dsize + n * 4 + c * 4 + n * 4,
    )

    per_row = pl.pallas_call(
        functools.partial(_balanced_entropy_kernel, n_total=n),
        out_shape=jax.ShapeDtypeStruct((n, 1), jnp.float32),
        grid=grid,
        in_specs=[
            pl.BlockSpec((block_n, c), lambda i: (i, 0)),   # logits tile
            pl.BlockSpec((block_n, 1), lambda i: (i, 0)),   # targets tile
            pl.BlockSpec((1, c), lambda i: (0, 0)),         # weights (resident)
        ],
        out_specs=pl.BlockSpec((block_n, 1), lambda i: (i, 0)),
        compiler_params=pltpu.CompilerParams(
            dimension_semantics=("parallel",),
            vmem_limit_bytes=32 * 1024 * 1024,
        ),
        cost_estimate=cost,
    )(logits, targets_2d, weights_2d)

    # Module semantics: plain mean over the batch (divide by N, not sum(w[t])).
    return jnp.sum(per_row) / jnp.float32(n)


def _reference(logits, targets, class_weights=None):
    # Pure-JAX reference mirroring the PyTorch module.
    log_probs = jax.nn.log_softmax(logits.astype(jnp.float32), axis=1)
    picked = log_probs[jnp.arange(logits.shape[0]), targets]
    if class_weights is not None:
        w = class_weights.astype(jnp.float32)[targets]
        loss = -w * picked
    else:
        loss = -picked
    return loss.mean()


if __name__ == "__main__":
    key = jax.random.PRNGKey(0)
    k1, k2, k3 = jax.random.split(key, 3)

    # Deliberately not a multiple of 8 to exercise the remainder-row masking.
    N, C = 10, 32
    logits = jax.random.normal(k1, (N, C), dtype=jnp.float32)
    targets = jax.random.randint(k2, (N,), 0, C, dtype=jnp.int32)
    class_weights = jax.random.uniform(k3, (C,), dtype=jnp.float32) + 0.5

    # Weighted path (f32 logits)
    loss_w = balanced_entropy_loss(logits, targets, class_weights)
    jax.block_until_ready(loss_w)
    ref_w = _reference(logits, targets, class_weights)
    assert jnp.allclose(loss_w, ref_w, rtol=1e-5, atol=1e-5), (loss_w, ref_w)

    # Unweighted path
    loss_u = balanced_entropy_loss(logits, targets, None)
    jax.block_until_ready(loss_u)
    ref_u = _reference(logits, targets, None)
    assert jnp.allclose(loss_u, ref_u, rtol=1e-5, atol=1e-5), (loss_u, ref_u)

    # bf16 logits path: no wrapper upcast, cast happens in-kernel.
    logits_bf16 = logits.astype(jnp.bfloat16)
    loss_b = balanced_entropy_loss(logits_bf16, targets, class_weights)
    jax.block_until_ready(loss_b)
    ref_b = _reference(logits_bf16, targets, class_weights)
    assert jnp.allclose(loss_b, ref_b, rtol=1e-4, atol=1e-4), (loss_b, ref_b)

    print("KERNEL_OK")
</pallas_src>

<mosaic_0001>
module attributes {stable_mosaic.version = 11 : i64} {
  func.func @_balanced_entropy_kernel(%arg0: i32, %arg1: memref<16x32xf32, #tpu.memory_space<vmem>>, %arg2: memref<16x1xi32, #tpu.memory_space<vmem>>, %arg3: memref<1x32xf32, #tpu.memory_space<vmem>>, %arg4: memref<16x1xf32, #tpu.memory_space<vmem>>) attributes {dimension_semantics = [#tpu.dimension_semantics<parallel>], iteration_bounds = array<i64: 1>, scalar_prefetch = 0 : i64, scratch_operands = 0 : i64, tpu.core_type = #tpu.core_type<tc>, window_params = [{transform_indices = @transform_0, window_bounds = array<i64: 16, 32>}, {transform_indices = @transform_1, window_bounds = array<i64: 16, 1>}, {pipeline_mode = #tpu.pipeline_mode<synchronous>, transform_indices = @transform_2, window_bounds = array<i64: 1, 32>}, {transform_indices = @transform_3, window_bounds = array<i64: 16, 1>}]} {
    %c0 = arith.constant 0 : index
    %c0_0 = arith.constant 0 : index
    %0 = vector.load %arg1[%c0, %c0_0] : memref<16x32xf32, #tpu.memory_space<vmem>>, vector<16x32xf32>
    %c0_1 = arith.constant 0 : index
    %c0_2 = arith.constant 0 : index
    %1 = vector.load %arg2[%c0_1, %c0_2] : memref<16x1xi32, #tpu.memory_space<vmem>>, vector<16x1xi32>
    %c0_3 = arith.constant 0 : index
    %c0_4 = arith.constant 0 : index
    %2 = vector.load %arg3[%c0_3, %c0_4] : memref<1x32xf32, #tpu.memory_space<vmem>>, vector<1x32xf32>
    %cst = arith.constant dense<0xFF800000> : vector<16xf32>
    %3 = vector.multi_reduction <maximumf>, %0, %cst [1] : vector<16x32xf32> to vector<16xf32>
    %4 = vector.shape_cast %3 : vector<16xf32> to vector<16x1xf32>
    %5 = vector.broadcast %4 : vector<16x1xf32> to vector<16x32xf32>
    %6 = arith.subf %0, %5 : vector<16x32xf32>
    %7 = math.exp %6 : vector<16x32xf32>
    %cst_5 = arith.constant dense<0.000000e+00> : vector<16xf32>
    %8 = vector.multi_reduction <add>, %7, %cst_5 [1] : vector<16x32xf32> to vector<16xf32>
    %9 = vector.shape_cast %8 : vector<16xf32> to vector<16x1xf32>
    %10 = math.log %9 : vector<16x1xf32>
    %11 = arith.addf %4, %10 : vector<16x1xf32>
    %12 = tpu.iota {dimensions = array<i32: 1>} : vector<16x32xi32>
    %13 = vector.broadcast %1 : vector<16x1xi32> to vector<16x32xi32>
    %14 = arith.cmpi eq, %12, %13 : vector<16x32xi32>
    %15 = vector.shape_cast %2 : vector<1x32xf32> to vector<1x32xf32>
    %16 = vector.broadcast %15 : vector<1x32xf32> to vector<16x32xf32>
    %17 = vector.broadcast %11 : vector<16x1xf32> to vector<16x32xf32>
    %18 = arith.subf %0, %17 : vector<16x32xf32>
    %19 = arith.mulf %16, %18 : vector<16x32xf32>
    %cst_6 = arith.constant 0.000000e+00 : f32
    %20 = vector.broadcast %cst_6 : f32 to vector<16x32xf32>
    %21 = arith.select %14, %19, %20 : vector<16x32xi1>, vector<16x32xf32>
    %cst_7 = arith.constant dense<0.000000e+00> : vector<16xf32>
    %22 = vector.multi_reduction <add>, %21, %cst_7 [1] : vector<16x32xf32> to vector<16xf32>
    %23 = vector.shape_cast %22 : vector<16xf32> to vector<16x1xf32>
    %cst_8 = arith.constant 0.000000e+00 : f32
    %24 = vector.broadcast %cst_8 : f32 to vector<16x1xf32>
    %25 = arith.subf %24, %23 : vector<16x1xf32>
    %c16_i32 = arith.constant 16 : i32
    %26 = arith.muli %arg0, %c16_i32 : i32
    %27 = tpu.iota {dimensions = array<i32: 0>} : vector<16x1xi32>
    %28 = vector.broadcast %26 : i32 to vector<16x1xi32>
    %29 = arith.addi %28, %27 : vector<16x1xi32>
    %c10_i32 = arith.constant 10 : i32
    %30 = vector.broadcast %c10_i32 : i32 to vector<16x1xi32>
    %31 = arith.cmpi slt, %29, %30 : vector<16x1xi32>
    %cst_9 = arith.constant 0.000000e+00 : f32
    %32 = vector.broadcast %cst_9 : f32 to vector<16x1xf32>
    %33 = arith.select %31, %25, %32 : vector<16x1xi1>, vector<16x1xf32>
    %c0_10 = arith.constant 0 : index
    %c0_11 = arith.constant 0 : index
    %34 = vector.load %arg4[%c0_10, %c0_11] : memref<16x1xf32, #tpu.memory_space<vmem>>, vector<16x1xf32>
    tpu.vector_store %arg4[%c0_10, %c0_11], %33 {strides = array<i32>} : memref<16x1xf32, #tpu.memory_space<vmem>>, vector<16x1xf32>,
    return
  }
  func.func @transform_0(%arg0: i32) -> (i32, i32) {
    %c0_i32 = arith.constant 0 : i32
    %c0_i32_0 = arith.constant 0 : i32
    return %arg0, %c0_i32 : i32, i32
  }
  func.func @transform_1(%arg0: i32) -> (i32, i32) {
    %c0_i32 = arith.constant 0 : i32
    %c0_i32_0 = arith.constant 0 : i32
    return %arg0, %c0_i32 : i32, i32
  }
  func.func @transform_2(%arg0: i32) -> (i32, i32) {
    %c0_i32 = arith.constant 0 : i32
    %c0_i32_0 = arith.constant 0 : i32
    %c0_i32_1 = arith.constant 0 : i32
    return %c0_i32, %c0_i32_0 : i32, i32
  }
  func.func @transform_3(%arg0: i32) -> (i32, i32) {
    %c0_i32 = arith.constant 0 : i32
    %c0_i32_0 = arith.constant 0 : i32
    return %arg0, %c0_i32 : i32, i32
  }
}

</mosaic_0001>

<llo_original>
// kernel: tpu_custom_call.1
$region0: #{tpu_custom_call.1}
  #allocation0 [shape = 'u32[]', space=smem, size = 0x4, offset = 0x4, fixed_abs, tag = 'smem constant byte address 0x4 - core index']
  #allocation1 [shape = 'u32[72,128]{1,0:T(1,128)}', space=vmem, size = 0x9000, scoped, tag = 'internal scratch']
  %s0 = inlined_call_operand.vmem [shape: f32[10,32], index: 0, kind: input, shape index: {}]
  %s1 = inlined_call_operand.vmem [shape: s32[10,1], index: 1, kind: input, shape index: {}]
  %s2 = inlined_call_operand.vmem [shape: f32[1,32], index: 2, kind: input, shape index: {}]
  %s3 = inlined_call_operand.vmem [shape: f32[10,1], index: 3, kind: output, shape index: {}]
  %s4 = sld [smem:[#allocation0]]
  $region22: #{tpu_custom_call.1} parent=0
    _
  %s6 = ssub.s32 1, %s4
  %s7 = scalar_select 0, %s6, %s4
  // Predicated region
  $region2: #{tpu_custom_call.1} parent=0 // pred_check
    _
  $region3: #{tpu_custom_call.1} parent=0 // pred_check_branch
    %9 = sbr.rel (0) target = $region5
  $region4: #{tpu_custom_call.1} parent=0 // pred_region
    _
  $region5: #{tpu_custom_call.1} parent=0 // pred_fallthru
    _
  // Predicated region
  $region6: #{tpu_custom_call.1} parent=0 // pred_check
    _
  $region7: #{tpu_custom_call.1} parent=0 // pred_check_branch
    %11 = sbr.rel (0) target = $region9
  $region8: #{tpu_custom_call.1} parent=0 // pred_region
    _
  $region9: #{tpu_custom_call.1} parent=0 // pred_fallthru
    _
  // Predicated region
  $region10: #{tpu_custom_call.1} parent=0 // pred_check
    _
  $region11: #{tpu_custom_call.1} parent=0 // pred_check_branch
    %13 = sbr.rel (0) target = $region13
  $region12: #{tpu_custom_call.1} parent=0 // pred_region
    _
  $region13: #{tpu_custom_call.1} parent=0 // pred_fallthru
    _
  %v14 = vld [vmem:[%s0] sm:$0xff]
  %v15 = vld [vmem:[%s0 + $0x8] sm:$0xff]
  %v16 = vld [vmem:[%s1] sm:$0xff]
  %v17 = vld [vmem:[%s1 + $0x8] sm:$0xff]
  %v18 = vld [vmem:[%s2] sm:$0x1]
  %vm19 = vcmask 261120
  %v20 = vsel %vm19, %v14, -inf
  %21 = vmax.xlane.f32.xlu0 %v20
  %v22 = vpop.xlane.xlu0 %21
  %v23 = vsel %vm19, %v15, -inf
  %24 = vmax.xlane.f32.xlu0 %v23
  %v25 = vpop.xlane.xlu0 %24
  %v26 = vsub.f32 %v14, %v22
  %v27 = vsub.f32 %v15, %v25
  %v28 = vmul.f32 %v26, 1.442695
  %v29 = vpow.pop %v28
  %v30 = vmul.f32 %v27, 1.442695
  %v31 = vpow.pop %v30
  %v32 = vsel %vm19, %v29, 0.0
  %33 = vadd.xlane.f32.xlu0 %v32
  %v34 = vpop.xlane.xlu0 %33
  %v35 = vsel %vm19, %v31, 0.0
  %36 = vadd.xlane.f32.xlu0 %v35
  %v37 = vpop.xlane.xlu0 %36
  %v38 = vlog2.pop %v34
  %v39 = vmul.f32 %v38, 0.6931472
  %v40 = vlog2.pop %v37
  %v41 = vmul.f32 %v40, 0.6931472
  %v42 = vadd.f32 %v22, %v39
  %v43 = vadd.f32 %v25, %v41
  %v44 = vlaneseq
  %v45 = vand.u32 %v44, 127
  %46 = vset.pattern.permute.xlu0 0
  %47 = vperm.xlu0 %46, %v16
  %v48 = vpop.permute.xlu0 %47
  %49 = vset.pattern.permute.xlu0 0
  %50 = vperm.xlu0 %49, %v17
  %v51 = vpop.permute.xlu0 %50
  %vm52 = vcmp.eq.s32.totalorder %v45, %v48
  %vm53 = vcmp.eq.s32.totalorder %v45, %v51
  %v55 = vperm.slane %v18, 0
  %v57 = vsub.f32 %v14, %v42
  %v58 = vsub.f32 %v15, %v43
  %v59 = vmul.f32 %v55, %v57
  %v60 = vmul.f32 %v55, %v58
  %v61 = vsel %vm52, %v59, 0.0
  %v62 = vsel %vm53, %v60, 0.0
  %v63 = vsel %vm19, %v61, 0.0
  %64 = vadd.xlane.f32.xlu0 %v63
  %v65 = vpop.xlane.xlu0 %64
  %v66 = vsel %vm19, %v62, 0.0
  %67 = vadd.xlane.f32.xlu0 %v66
  %v68 = vpop.xlane.xlu0 %67
  %v69 = vsub.f32 0.0, %v65
  %v70 = vsub.f32 0.0, %v68
  %s71 = smul.u32 0, 16
  %v72 = vlaneseq
  %v73 = vshrl.u32 %v72, 7
  %v74 = vadd.s32 %v73, 8
  %v75 = vstv %s71
  %v76 = vadd.s32 %v75, %v73
  %v77 = vadd.s32 %v75, %v74
  %vm78 = vcmp.lt.s32.totalorder %v76, 10
  %vm79 = vcmp.lt.s32.totalorder %v77, 10
  %v80 = vsel %vm78, %v69, 0.0
  %v81 = vsel %vm79, %v70, 0.0
  %vm82 = vcmask 7168
  %83 = vst.msk [vmem:[%s3] sm:$0xff] %vm82, %v80
  %84 = vst.msk [vmem:[%s3 + $0x8] sm:$0xff] %vm82, %v81
  // Predicated region
  $region14: #{tpu_custom_call.1} parent=0 // pred_check
    _
  $region15: #{tpu_custom_call.1} parent=0 // pred_check_branch
    %86 = sbr.rel (0) target = $region17
  $region16: #{tpu_custom_call.1} parent=0 // pred_region
    _
  $region17: #{tpu_custom_call.1} parent=0 // pred_fallthru
    _
  // Predicated region
  $region18: #{tpu_custom_call.1} parent=0 // pred_check
    _
  $region19: #{tpu_custom_call.1} parent=0 // pred_check_branch
    %88 = sbr.rel (0) target = $region21
  $region20: #{tpu_custom_call.1} parent=0 // pred_region
    _
  $region21: #{tpu_custom_call.1} parent=0 // pred_fallthru
    _

</llo_original>
